<compile_context>
chip_gen: v6e
topology: v6e:2x2x1
jax: 0.10.0
libtpu: 0.0.40
codegen_flags: <defaults>
</compile_context>

<pallas_src>
import functools

import jax
import jax.numpy as jnp
import numpy as np
from jax.experimental import pallas as pl
from jax.experimental.pallas import tpu as pltpu


def _round_up(x, m):
    return (x + m - 1) // m * m


def _vmem_capacity_bytes():
    try:
        return int(pltpu.get_tpu_info().vmem_capacity_bytes)
    except Exception:
        return 64 * 1024 * 1024          # conservative default (v7x per-TensorCore)


def _resident_spec(block_shape):
    """Constant-index-map BlockSpec; single-buffered when the API supports it."""
    idx = lambda i: (0, 0)
    try:
        return pl.BlockSpec(block_shape, idx, pipeline_mode=pl.Buffered(1))
    except Exception:
        return pl.BlockSpec(block_shape, idx)


def _lstm_cell_kernel(x_ref, h_ref, c_ref, wx_ref, wh_ref, b_ref,
                      hy_ref, cy_ref, ig_ref, fg_ref, og_ref):
    cdt = wx_ref.dtype
    # Two accumulating MXU matmuls (K=I then K=H), f32 accumulation, f32 bias.
    gates = (jnp.dot(x_ref[...].astype(cdt), wx_ref[...],
                     preferred_element_type=jnp.float32)
             + jnp.dot(h_ref[...].astype(cdt), wh_ref[...],
                       preferred_element_type=jnp.float32)
             + b_ref[...])                                   # (tm, 4*Hp) f32

    Hp = hy_ref.shape[-1]
    # Hp is a multiple of 128 -> vreg-aligned lane slices (no shuffles).
    ingate     = jax.nn.sigmoid(gates[:, 0 * Hp:1 * Hp])
    forgetgate = jax.nn.sigmoid(gates[:, 1 * Hp:2 * Hp])
    cy_tilde   = jnp.tanh(      gates[:, 2 * Hp:3 * Hp])
    outgate    = jax.nn.sigmoid(gates[:, 3 * Hp:4 * Hp])

    cy = forgetgate * c_ref[...].astype(jnp.float32) + ingate * cy_tilde
    hy = outgate * jnp.tanh(cy)

    hy_ref[...] = hy.astype(hy_ref.dtype)
    cy_ref[...] = cy.astype(cy_ref.dtype)
    ig_ref[...] = ingate.astype(ig_ref.dtype)
    fg_ref[...] = forgetgate.astype(fg_ref.dtype)
    og_ref[...] = outgate.astype(og_ref.dtype)


def _pack_weight(w, H, Hp, dtype):
    """(4H, K) torch-layout weight -> (K, 4*Hp), torch gate order preserved."""
    K = w.shape[1]
    wt = jnp.transpose(w)                            # (K, 4H)
    if Hp != H:
        wt = jnp.pad(wt.reshape(K, 4, H), ((0, 0), (0, 0), (0, Hp - H)))
        wt = wt.reshape(K, 4 * Hp)
    return wt.astype(dtype)


def _pack_bias(b_ih, b_hh, H, Hp):
    bias = jnp.zeros((4 * H,), jnp.float32)
    if b_ih is not None:
        bias = bias + b_ih.astype(jnp.float32)
    if b_hh is not None:
        bias = bias + b_hh.astype(jnp.float32)
    if Hp != H:
        bias = jnp.pad(bias.reshape(4, H), ((0, 0), (0, Hp - H))).reshape(4 * Hp)
    return bias.reshape(1, 4 * Hp)


@functools.partial(jax.jit, static_argnames=("num_layers", "matmul_dtype"))
def analysable_lstm_cell(x, hidden, w_ih, w_hh, b_ih=None, b_hh=None, *,
                         num_layers=1, matmul_dtype=jnp.bfloat16):
    """JAX/Pallas equivalent of AnalysableLSTMCell.forward.

    x : (L, B, I) ; hidden = (hx, cx) each (L, B, H)
    w_ih : (4H, I) ; w_hh : (4H, H) ; b_ih, b_hh : (4H,) or None
    matmul_dtype : MXU operand dtype (bf16 default; pass jnp.float32 for
                   exact f32 parity with the torch module).
    returns (output, (hy, cy), gates_dict)
    """
    hx, cx = hidden
    L, B, I = x.shape
    H = hx.shape[-1]
    M = L * B
    Hp = _round_up(H, 128)          # lane-dense per-gate width

    in_b = jnp.dtype(x.dtype).itemsize
    out_b = jnp.dtype(x.dtype).itemsize
    w_b = jnp.dtype(matmul_dtype).itemsize

    # ---- generation-aware VMEM / tile budget ----
    vmem_cap = _vmem_capacity_bytes()
    vmem_budget = int(0.75 * vmem_cap)
    big_part = vmem_cap >= 100 * 1024 * 1024        # v5e/v6e (128 MiB) vs v7x (64 MiB)

    resident_bytes = (I + H) * 4 * Hp * w_b + 4 * Hp * 4     # w_x + w_h + f32 bias
    # TODO(synk): for very large H the resident (I+H, 4*Hp) weight can exceed the
    # VMEM budget (especially on v7x's 64 MiB); that case needs a second grid axis
    # over the 4*Hp gate dimension.

    # Streamed bytes per row (double-buffered tiles) + in-kernel f32 temporaries
    # (the (tm, 4*Hp) f32 gates accumulator and activation intermediates).
    bytes_per_row = (2 * ((I + H + Hp) * in_b + 5 * Hp * out_b)
                     + 2 * 4 * Hp * 4)
    stream_budget = max(2 * 1024 * 1024, vmem_budget - resident_bytes - (2 << 20))
    stream_budget = min(stream_budget, (40 << 20) if big_part else (16 << 20))

    tm = stream_budget // bytes_per_row
    tm = max(8, min(1024, tm))
    tm = min(tm, _round_up(M, 8))
    tm = (tm // 128) * 128 if tm >= 128 else max(8, (tm // 8) * 8)
    # Ensure >= 2 grid steps for large-enough M so ("parallel",) can shard
    # across v7x's two TensorCores.
    if _round_up(M, tm) // tm < 2 and M >= 256:
        tm = max(128, _round_up((M + 1) // 2, 128))
    Mp = _round_up(M, tm)

    # ---- build inputs (no x|h concatenate: they are streamed separately) ----
    x2 = x.reshape(M, I)
    h2 = hx.reshape(M, H)
    c2 = cx.reshape(M, H)
    if Hp != H:
        c2 = jnp.pad(c2, ((0, 0), (0, Hp - H)))
    if Mp != M:
        pad = ((0, Mp - M), (0, 0))
        x2 = jnp.pad(x2, pad)
        h2 = jnp.pad(h2, pad)
        c2 = jnp.pad(c2, pad)

    # NOTE: weight/bias packing is weight-only; when this cell is driven inside
    # a per-timestep loop, hoist these (and ideally the whole time loop) out of
    # the per-step call so the weights stay VMEM-resident across time.
    wx = _pack_weight(w_ih, H, Hp, matmul_dtype)     # (I, 4*Hp)
    wh = _pack_weight(w_hh, H, Hp, matmul_dtype)     # (H, 4*Hp)
    bias = _pack_bias(b_ih, b_hh, H, Hp)             # (1, 4*Hp) f32

    out_shapes = tuple(jax.ShapeDtypeStruct((Mp, Hp), x.dtype) for _ in range(5))

    est_vmem = resident_bytes + tm * bytes_per_row + (1 << 20)
    vmem_limit = int(min(vmem_budget, max(24 << 20, int(1.3 * est_vmem))))

    cost = pl.CostEstimate(
        flops=2 * Mp * (I + H) * 4 * Hp,
        transcendentals=6 * Mp * Hp,                 # 4 sigmoid + 2 tanh per elem
        bytes_accessed=(in_b * (Mp * I + Mp * H + Mp * Hp)
                        + w_b * (I + H) * 4 * Hp + 4 * 4 * Hp
                        + out_b * 5 * Mp * Hp),
    )

    hy2, cy2, ig2, fg2, og2 = pl.pallas_call(
        _lstm_cell_kernel,
        out_shape=out_shapes,
        grid_spec=pltpu.PrefetchScalarGridSpec(
            num_scalar_prefetch=0,
            grid=(Mp // tm,),
            in_specs=[
                pl.BlockSpec((tm, I), lambda i: (i, 0)),      # x rows  (streamed)
                pl.BlockSpec((tm, H), lambda i: (i, 0)),      # h rows  (streamed)
                pl.BlockSpec((tm, Hp), lambda i: (i, 0)),     # c rows  (streamed)
                _resident_spec((I, 4 * Hp)),                  # w_x (VMEM-resident)
                _resident_spec((H, 4 * Hp)),                  # w_h (VMEM-resident)
                _resident_spec((1, 4 * Hp)),                  # bias (resident, f32)
            ],
            out_specs=tuple(pl.BlockSpec((tm, Hp), lambda i: (i, 0))
                            for _ in range(5)),
        ),
        compiler_params=pltpu.CompilerParams(
            dimension_semantics=("parallel",),
            vmem_limit_bytes=vmem_limit,
        ),
        cost_estimate=cost,
    )(x2, h2, c2, wx, wh, bias)

    hy = hy2[:M, :H].reshape(L, B, H)
    cy = cy2[:M, :H].reshape(L, B, H)
    gates = {
        'input_gate_activations':  ig2[:M, :H].reshape(L, B, H),
        'forget_gate_activations': fg2[:M, :H].reshape(L, B, H),
        'output_gate_activations': og2[:M, :H].reshape(L, B, H),
    }
    output = hy[num_layers - 1][None]     # hy[num_layers-1].unsqueeze(0)
    return output, (hy, cy), gates


# ----------------------------- reference & test -----------------------------

def _reference(x, hidden, w_ih, w_hh, b_ih, b_hh, num_layers, matmul_dtype):
    hx, cx = hidden
    cd = matmul_dtype
    gates = (jnp.einsum('lbi,gi->lbg', x.astype(cd), w_ih.astype(cd),
                        preferred_element_type=jnp.float32)
             + jnp.einsum('lbh,gh->lbg', hx.astype(cd), w_hh.astype(cd),
                          preferred_element_type=jnp.float32))
    if b_ih is not None:
        gates = gates + b_ih.astype(jnp.float32)
    if b_hh is not None:
        gates = gates + b_hh.astype(jnp.float32)
    H = hx.shape[-1]
    ig, fg, ct, og = (gates[..., 0:H], gates[..., H:2 * H],
                      gates[..., 2 * H:3 * H], gates[..., 3 * H:4 * H])
    ig = jax.nn.sigmoid(ig); fg = jax.nn.sigmoid(fg)
    ct = jnp.tanh(ct); og = jax.nn.sigmoid(og)
    cy = fg * cx.astype(jnp.float32) + ig * ct
    hy = og * jnp.tanh(cy)
    return hy[num_layers - 1][None], hy, cy, ig, fg, og


def _check_one(L, B, I, H, seed, matmul_dtype, rtol, atol):
    key = jax.random.PRNGKey(seed)
    kx, kh, kc, kwi, kwh, kbi, kbh = jax.random.split(key, 7)
    x    = jax.random.normal(kx,  (L, B, I), dtype=jnp.float32)
    hx   = jax.random.normal(kh,  (L, B, H), dtype=jnp.float32)
    cx   = jax.random.normal(kc,  (L, B, H), dtype=jnp.float32)
    w_ih = jax.random.normal(kwi, (4 * H, I), dtype=jnp.float32) * 0.1
    w_hh = jax.random.normal(kwh, (4 * H, H), dtype=jnp.float32) * 0.1
    b_ih = jax.random.normal(kbi, (4 * H,),   dtype=jnp.float32) * 0.1
    b_hh = jax.random.normal(kbh, (4 * H,),   dtype=jnp.float32) * 0.1

    output, (hy, cy), gates = analysable_lstm_cell(
        x, (hx, cx), w_ih, w_hh, b_ih, b_hh,
        num_layers=L, matmul_dtype=matmul_dtype)
    jax.block_until_ready((output, hy, cy, gates))

    ro, rhy, rcy, rig, rfg, rog = _reference(
        x, (hx, cx), w_ih, w_hh, b_ih, b_hh, L, matmul_dtype)
    tol = dict(rtol=rtol, atol=atol)
    np.testing.assert_allclose(np.asarray(output), np.asarray(ro), **tol)
    np.testing.assert_allclose(np.asarray(hy), np.asarray(rhy), **tol)
    np.testing.assert_allclose(np.asarray(cy), np.asarray(rcy), **tol)
    np.testing.assert_allclose(np.asarray(gates['input_gate_activations']),
                               np.asarray(rig), **tol)
    np.testing.assert_allclose(np.asarray(gates['forget_gate_activations']),
                               np.asarray(rfg), **tol)
    np.testing.assert_allclose(np.asarray(gates['output_gate_activations']),
                               np.asarray(rog), **tol)


if __name__ == "__main__":
    # Small, LSTM-cell-consistent shapes:
    #   num_layers L=2, batch B=4, input_size I=32, hidden_size H=32
    # Default bf16 MXU path (checked against a bf16-cast reference).
    _check_one(L=2, B=4, I=32, H=32, seed=0,
               matmul_dtype=jnp.bfloat16, rtol=2e-3, atol=2e-3)
    # Non-aligned shapes to exercise row/lane padding paths.
    _check_one(L=2, B=3, I=20, H=24, seed=0,
               matmul_dtype=jnp.bfloat16, rtol=2e-3, atol=2e-3)
    # Exact-parity f32 MXU path (tight tolerance against the f32 reference).
    _check_one(L=2, B=4, I=32, H=32, seed=1,
               matmul_dtype=jnp.float32, rtol=1e-5, atol=1e-5)
    print("KERNEL_OK")
</pallas_src>

<mosaic_0001>
module attributes {stable_mosaic.version = 11 : i64} {
  func.func @_lstm_cell_kernel(%arg0: i32, %arg1: memref<8x32xf32, #tpu.memory_space<vmem>>, %arg2: memref<8x32xf32, #tpu.memory_space<vmem>>, %arg3: memref<8x128xf32, #tpu.memory_space<vmem>>, %arg4: memref<32x512xbf16, #tpu.memory_space<vmem>>, %arg5: memref<32x512xbf16, #tpu.memory_space<vmem>>, %arg6: memref<1x512xf32, #tpu.memory_space<vmem>>, %arg7: memref<8x128xf32, #tpu.memory_space<vmem>>, %arg8: memref<8x128xf32, #tpu.memory_space<vmem>>, %arg9: memref<8x128xf32, #tpu.memory_space<vmem>>, %arg10: memref<8x128xf32, #tpu.memory_space<vmem>>, %arg11: memref<8x128xf32, #tpu.memory_space<vmem>>) attributes {dimension_semantics = [#tpu.dimension_semantics<parallel>], iteration_bounds = array<i64: 1>, scalar_prefetch = 0 : i64, scratch_operands = 0 : i64, tpu.core_type = #tpu.core_type<tc>, window_params = [{transform_indices = @transform_0, window_bounds = array<i64: 8, 32>}, {transform_indices = @transform_1, window_bounds = array<i64: 8, 32>}, {transform_indices = @transform_2, window_bounds = array<i64: 8, 128>}, {pipeline_mode = #tpu.pipeline_mode<synchronous>, transform_indices = @transform_3, window_bounds = array<i64: 32, 512>}, {pipeline_mode = #tpu.pipeline_mode<synchronous>, transform_indices = @transform_4, window_bounds = array<i64: 32, 512>}, {pipeline_mode = #tpu.pipeline_mode<synchronous>, transform_indices = @transform_5, window_bounds = array<i64: 1, 512>}, {transform_indices = @transform_6, window_bounds = array<i64: 8, 128>}, {transform_indices = @transform_7, window_bounds = array<i64: 8, 128>}, {transform_indices = @transform_8, window_bounds = array<i64: 8, 128>}, {transform_indices = @transform_9, window_bounds = array<i64: 8, 128>}, {transform_indices = @transform_10, window_bounds = array<i64: 8, 128>}]} {
    %c0 = arith.constant 0 : index
    %c0_0 = arith.constant 0 : index
    %0 = vector.load %arg1[%c0, %c0_0] : memref<8x32xf32, #tpu.memory_space<vmem>>, vector<8x32xf32>
    %1 = arith.truncf %0 : vector<8x32xf32> to vector<8x32xbf16>
    %c0_1 = arith.constant 0 : index
    %c0_2 = arith.constant 0 : index
    %2 = vector.load %arg4[%c0_1, %c0_2] : memref<32x512xbf16, #tpu.memory_space<vmem>>, vector<32x512xbf16>
    %cst = arith.constant dense<0.000000e+00> : vector<8x512xf32>
    %3 = tpu.matmul %1, %2, %cst {dimension_numbers = #tpu.dot_dimension_numbers<[1], [0], [0], [1], [0, 0, 1, 1], [], []>} : vector<8x32xbf16>, vector<32x512xbf16>, vector<8x512xf32> -> vector<8x512xf32>
    %c0_3 = arith.constant 0 : index
    %c0_4 = arith.constant 0 : index
    %4 = vector.load %arg2[%c0_3, %c0_4] : memref<8x32xf32, #tpu.memory_space<vmem>>, vector<8x32xf32>
    %5 = arith.truncf %4 : vector<8x32xf32> to vector<8x32xbf16>
    %c0_5 = arith.constant 0 : index
    %c0_6 = arith.constant 0 : index
    %6 = vector.load %arg5[%c0_5, %c0_6] : memref<32x512xbf16, #tpu.memory_space<vmem>>, vector<32x512xbf16>
    %cst_7 = arith.constant dense<0.000000e+00> : vector<8x512xf32>
    %7 = tpu.matmul %5, %6, %cst_7 {dimension_numbers = #tpu.dot_dimension_numbers<[1], [0], [0], [1], [0, 0, 1, 1], [], []>} : vector<8x32xbf16>, vector<32x512xbf16>, vector<8x512xf32> -> vector<8x512xf32>
    %8 = arith.addf %3, %7 : vector<8x512xf32>
    %c0_8 = arith.constant 0 : index
    %c0_9 = arith.constant 0 : index
    %9 = vector.load %arg6[%c0_8, %c0_9] : memref<1x512xf32, #tpu.memory_space<vmem>>, vector<1x512xf32>
    %10 = vector.broadcast %9 : vector<1x512xf32> to vector<8x512xf32>
    %11 = arith.addf %8, %10 : vector<8x512xf32>
    %12 = vector.extract_strided_slice %11 {offsets = [0, 0], sizes = [8, 128], strides = [1, 1]} : vector<8x512xf32> to vector<8x128xf32>
    %13 = arith.negf %12 : vector<8x128xf32>
    %14 = math.exp %13 : vector<8x128xf32>
    %cst_10 = arith.constant 1.000000e+00 : f32
    %15 = vector.broadcast %cst_10 : f32 to vector<8x128xf32>
    %16 = arith.addf %15, %14 : vector<8x128xf32>
    %17 = arith.divf %15, %16 : vector<8x128xf32>
    %18 = vector.extract_strided_slice %11 {offsets = [0, 128], sizes = [8, 128], strides = [1, 1]} : vector<8x512xf32> to vector<8x128xf32>
    %19 = arith.negf %18 : vector<8x128xf32>
    %20 = math.exp %19 : vector<8x128xf32>
    %cst_11 = arith.constant 1.000000e+00 : f32
    %21 = vector.broadcast %cst_11 : f32 to vector<8x128xf32>
    %22 = arith.addf %21, %20 : vector<8x128xf32>
    %23 = arith.divf %21, %22 : vector<8x128xf32>
    %24 = vector.extract_strided_slice %11 {offsets = [0, 256], sizes = [8, 128], strides = [1, 1]} : vector<8x512xf32> to vector<8x128xf32>
    %25 = math.tanh %24 : vector<8x128xf32>
    %26 = vector.extract_strided_slice %11 {offsets = [0, 384], sizes = [8, 128], strides = [1, 1]} : vector<8x512xf32> to vector<8x128xf32>
    %27 = arith.negf %26 : vector<8x128xf32>
    %28 = math.exp %27 : vector<8x128xf32>
    %cst_12 = arith.constant 1.000000e+00 : f32
    %29 = vector.broadcast %cst_12 : f32 to vector<8x128xf32>
    %30 = arith.addf %29, %28 : vector<8x128xf32>
    %31 = arith.divf %29, %30 : vector<8x128xf32>
    %c0_13 = arith.constant 0 : index
    %c0_14 = arith.constant 0 : index
    %32 = vector.load %arg3[%c0_13, %c0_14] : memref<8x128xf32, #tpu.memory_space<vmem>>, vector<8x128xf32>
    %33 = arith.mulf %23, %32 : vector<8x128xf32>
    %34 = arith.mulf %17, %25 : vector<8x128xf32>
    %35 = arith.addf %33, %34 : vector<8x128xf32>
    %36 = math.tanh %35 : vector<8x128xf32>
    %37 = arith.mulf %31, %36 : vector<8x128xf32>
    %c0_15 = arith.constant 0 : index
    %c0_16 = arith.constant 0 : index
    %38 = vector.load %arg7[%c0_15, %c0_16] : memref<8x128xf32, #tpu.memory_space<vmem>>, vector<8x128xf32>
    tpu.vector_store %arg7[%c0_15, %c0_16], %37 {strides = array<i32>} : memref<8x128xf32, #tpu.memory_space<vmem>>, vector<8x128xf32>,
    %c0_17 = arith.constant 0 : index
    %c0_18 = arith.constant 0 : index
    %39 = vector.load %arg8[%c0_17, %c0_18] : memref<8x128xf32, #tpu.memory_space<vmem>>, vector<8x128xf32>
    tpu.vector_store %arg8[%c0_17, %c0_18], %35 {strides = array<i32>} : memref<8x128xf32, #tpu.memory_space<vmem>>, vector<8x128xf32>,
    %c0_19 = arith.constant 0 : index
    %c0_20 = arith.constant 0 : index
    %40 = vector.load %arg9[%c0_19, %c0_20] : memref<8x128xf32, #tpu.memory_space<vmem>>, vector<8x128xf32>
    tpu.vector_store %arg9[%c0_19, %c0_20], %17 {strides = array<i32>} : memref<8x128xf32, #tpu.memory_space<vmem>>, vector<8x128xf32>,
    %c0_21 = arith.constant 0 : index
    %c0_22 = arith.constant 0 : index
    %41 = vector.load %arg10[%c0_21, %c0_22] : memref<8x128xf32, #tpu.memory_space<vmem>>, vector<8x128xf32>
    tpu.vector_store %arg10[%c0_21, %c0_22], %23 {strides = array<i32>} : memref<8x128xf32, #tpu.memory_space<vmem>>, vector<8x128xf32>,
    %c0_23 = arith.constant 0 : index
    %c0_24 = arith.constant 0 : index
    %42 = vector.load %arg11[%c0_23, %c0_24] : memref<8x128xf32, #tpu.memory_space<vmem>>, vector<8x128xf32>
    tpu.vector_store %arg11[%c0_23, %c0_24], %31 {strides = array<i32>} : memref<8x128xf32, #tpu.memory_space<vmem>>, vector<8x128xf32>,
    return
  }
  func.func @transform_0(%arg0: i32) -> (i32, i32) {
    %c0_i32 = arith.constant 0 : i32
    %c0_i32_0 = arith.constant 0 : i32
    return %arg0, %c0_i32 : i32, i32
  }
  func.func @transform_1(%arg0: i32) -> (i32, i32) {
    %c0_i32 = arith.constant 0 : i32
    %c0_i32_0 = arith.constant 0 : i32
    return %arg0, %c0_i32 : i32, i32
  }
  func.func @transform_2(%arg0: i32) -> (i32, i32) {
    %c0_i32 = arith.constant 0 : i32
    %c0_i32_0 = arith.constant 0 : i32
    return %arg0, %c0_i32 : i32, i32
  }
  func.func @transform_3(%arg0: i32) -> (i32, i32) {
    %c0_i32 = arith.constant 0 : i32
    %c0_i32_0 = arith.constant 0 : i32
    %c0_i32_1 = arith.constant 0 : i32
    return %c0_i32, %c0_i32_0 : i32, i32
  }
  func.func @transform_4(%arg0: i32) -> (i32, i32) {
    %c0_i32 = arith.constant 0 : i32
    %c0_i32_0 = arith.constant 0 : i32
    %c0_i32_1 = arith.constant 0 : i32
    return %c0_i32, %c0_i32_0 : i32, i32
  }
  func.func @transform_5(%arg0: i32) -> (i32, i32) {
    %c0_i32 = arith.constant 0 : i32
    %c0_i32_0 = arith.constant 0 : i32
    %c0_i32_1 = arith.constant 0 : i32
    return %c0_i32, %c0_i32_0 : i32, i32
  }
  func.func @transform_6(%arg0: i32) -> (i32, i32) {
    %c0_i32 = arith.constant 0 : i32
    %c0_i32_0 = arith.constant 0 : i32
    return %arg0, %c0_i32 : i32, i32
  }
  func.func @transform_7(%arg0: i32) -> (i32, i32) {
    %c0_i32 = arith.constant 0 : i32
    %c0_i32_0 = arith.constant 0 : i32
    return %arg0, %c0_i32 : i32, i32
  }
  func.func @transform_8(%arg0: i32) -> (i32, i32) {
    %c0_i32 = arith.constant 0 : i32
    %c0_i32_0 = arith.constant 0 : i32
    return %arg0, %c0_i32 : i32, i32
  }
  func.func @transform_9(%arg0: i32) -> (i32, i32) {
    %c0_i32 = arith.constant 0 : i32
    %c0_i32_0 = arith.constant 0 : i32
    return %arg0, %c0_i32 : i32, i32
  }
  func.func @transform_10(%arg0: i32) -> (i32, i32) {
    %c0_i32 = arith.constant 0 : i32
    %c0_i32_0 = arith.constant 0 : i32
    return %arg0, %c0_i32 : i32, i32
  }
}

</mosaic_0001>

<llo_original>
// kernel: analysable_lstm_cell.1
$region0: #{analysable_lstm_cell.1}
  #allocation0 [shape = 'u32[]', space=smem, size = 0x4, offset = 0x4, fixed_abs, tag = 'smem constant byte address 0x4 - core index']
  #allocation1 [shape = 'u32[144,128]{1,0:T(1,128)}', space=vmem, size = 0x12000, scoped, tag = 'internal scratch']
  %s0 = inlined_call_operand.vmem [shape: f32[8,32], index: 0, kind: input, shape index: {}]
  %s1 = inlined_call_operand.vmem [shape: f32[8,32], index: 1, kind: input, shape index: {}]
  %s2 = inlined_call_operand.vmem [shape: f32[8,128], index: 2, kind: input, shape index: {}]
  %s3 = inlined_call_operand.vmem [shape: bf16[32,512], index: 3, kind: input, shape index: {}]
  %s4 = inlined_call_operand.vmem [shape: bf16[32,512], index: 4, kind: input, shape index: {}]
  %s5 = inlined_call_operand.vmem [shape: f32[1,512], index: 5, kind: input, shape index: {}]
  %s6 = inlined_call_operand.vmem [shape: f32[8,128], index: 6, kind: output, shape index: {0}]
  %s7 = inlined_call_operand.hbm [shape: f32[8,128], index: 7, kind: output, shape index: {1}]
  %s8 = inlined_call_operand.hbm [shape: f32[8,128], index: 8, kind: output, shape index: {2}]
  %s9 = inlined_call_operand.hbm [shape: f32[8,128], index: 9, kind: output, shape index: {3}]
  %s10 = inlined_call_operand.hbm [shape: f32[8,128], index: 10, kind: output, shape index: {4}]
  %11 = xla_tuple %s6, %s7, %s8, %s9, %s10
  %s12 = sld [smem:[#allocation0]]
  $region66: #{analysable_lstm_cell.1} parent=0
    _
  %s14 = ssub.s32 1, %s12
  %s15 = scalar_select 0, %s14, %s12
  $region1: #{analysable_lstm_cell.1} parent=0
    #allocation2 [shape = 'u8[4096]{0}', space=vmem, size = 0x1000, scoped, tag = 'output window, operand 1, single buffered']
    #allocation3 [shape = 's32[1]{0}', space=sflag, size = 0x4, scoped, tag = 'scoped memory for analysable_lstm_cell.1']
    #allocation4 [shape = 'u8[4096]{0}', space=vmem, size = 0x1000, scoped, tag = 'output window, operand 2, single buffered']
    #allocation5 [shape = 's32[1]{0}', space=sflag, size = 0x4, scoped, tag = 'scoped memory for analysable_lstm_cell.1']
    #allocation6 [shape = 'u8[4096]{0}', space=vmem, size = 0x1000, scoped, tag = 'output window, operand 3, single buffered']
    #allocation7 [shape = 'u8[4096]{0}', space=vmem, size = 0x1000, scoped, tag = 'output window, operand 4, single buffered']
    #allocation8 [shape = 's32[1]{0}', space=sflag, size = 0x4, scoped, tag = 'scoped memory for analysable_lstm_cell.1']
    %16 = vsyncpa [#allocation3], 0
    %17 = vsyncpa [#allocation5], 0
    %18 = vsyncpa [#allocation8], 0
    // Predicated region
    $region2: #{analysable_lstm_cell.1} parent=1 // pred_check
      _
    $region3: #{analysable_lstm_cell.1} parent=1 // pred_check_branch
      %20 = sbr.rel (0) target = $region5
    $region4: #{analysable_lstm_cell.1} parent=1 // pred_region
      _
    $region5: #{analysable_lstm_cell.1} parent=1 // pred_fallthru
      _
    // Predicated region
    $region6: #{analysable_lstm_cell.1} parent=1 // pred_check
      _
    $region7: #{analysable_lstm_cell.1} parent=1 // pred_check_branch
      %22 = sbr.rel (0) target = $region9
    $region8: #{analysable_lstm_cell.1} parent=1 // pred_region
      _
    $region9: #{analysable_lstm_cell.1} parent=1 // pred_fallthru
      _
    // Predicated region
    $region10: #{analysable_lstm_cell.1} parent=1 // pred_check
      _
    $region11: #{analysable_lstm_cell.1} parent=1 // pred_check_branch
      %24 = sbr.rel (0) target = $region13
    $region12: #{analysable_lstm_cell.1} parent=1 // pred_region
      _
    $region13: #{analysable_lstm_cell.1} parent=1 // pred_fallthru
      _
    // Predicated region
    $region14: #{analysable_lstm_cell.1} parent=1 // pred_check
      _
    $region15: #{analysable_lstm_cell.1} parent=1 // pred_check_branch
      %26 = sbr.rel (0) target = $region17
    $region16: #{analysable_lstm_cell.1} parent=1 // pred_region
      _
    $region17: #{analysable_lstm_cell.1} parent=1 // pred_fallthru
      _
    // Predicated region
    $region18: #{analysable_lstm_cell.1} parent=1 // pred_check
      _
    $region19: #{analysable_lstm_cell.1} parent=1 // pred_check_branch
      %28 = sbr.rel (0) target = $region21
    $region20: #{analysable_lstm_cell.1} parent=1 // pred_region
      _
    $region21: #{analysable_lstm_cell.1} parent=1 // pred_fallthru
      _
    // Predicated region
    $region22: #{analysable_lstm_cell.1} parent=1 // pred_check
      _
    $region23: #{analysable_lstm_cell.1} parent=1 // pred_check_branch
      %30 = sbr.rel (0) target = $region25
    $region24: #{analysable_lstm_cell.1} parent=1 // pred_region
      _
    $region25: #{analysable_lstm_cell.1} parent=1 // pred_fallthru
      _
    %v32 = vld [vmem:[%s0] sm:$0xff]
    %v33 = vpack.c.bf16 %v32, %v32
    %v34 = vld [vmem:[%s3] sm:$0xff]
    %v35 = vld [vmem:[%s3 + $0x8] sm:$0xff]
    %v36 = vld [vmem:[%s3 + $0x10] sm:$0xff]
    %v37 = vld [vmem:[%s3 + $0x18] sm:$0xff]
    %v38 = vld [vmem:[%s3 + $0x20] sm:$0xff]
    %v39 = vld [vmem:[%s3 + $0x28] sm:$0xff]
    %v40 = vld [vmem:[%s3 + $0x30] sm:$0xff]
    %v41 = vld [vmem:[%s3 + $0x38] sm:$0xff]
    %v42 = vld [vmem:[%s1] sm:$0xff]
    %v43 = vpack.c.bf16 %v42, %v42
    %v44 = vld [vmem:[%s4] sm:$0xff]
    %v45 = vld [vmem:[%s4 + $0x8] sm:$0xff]
    %v46 = vld [vmem:[%s4 + $0x10] sm:$0xff]
    %v47 = vld [vmem:[%s4 + $0x18] sm:$0xff]
    %v48 = vld [vmem:[%s4 + $0x20] sm:$0xff]
    %v49 = vld [vmem:[%s4 + $0x28] sm:$0xff]
    %v50 = vld [vmem:[%s4 + $0x30] sm:$0xff]
    %v51 = vld [vmem:[%s4 + $0x38] sm:$0xff]
    %v60 = vunpack.c.l.b16 %v44
    %v61 = vunpack.c.h.b16 %v44
    %v62 = vunpack.c.l.b16 %v45
    %v63 = vunpack.c.h.b16 %v45
    %v64 = vunpack.c.l.b16 %v46
    %v65 = vunpack.c.h.b16 %v46
    %v66 = vunpack.c.l.b16 %v47
    %v67 = vunpack.c.h.b16 %v47
    %v68 = vunpack.c.l.b16 %v48
    %v69 = vunpack.c.h.b16 %v48
    %v70 = vunpack.c.l.b16 %v49
    %v71 = vunpack.c.h.b16 %v49
    %v72 = vunpack.c.l.b16 %v50
    %v73 = vunpack.c.h.b16 %v50
    %v74 = vunpack.c.l.b16 %v51
    %v75 = vunpack.c.h.b16 %v51
    %v76 = vpack.c.b16 %v64, %v60
    %v77 = vpack.c.b16 %v65, %v61
    %v78 = vpack.c.b16 %v66, %v62
    %v79 = vpack.c.b16 %v67, %v63
    %v80 = vpack.c.b16 %v72, %v68
    %v81 = vpack.c.b16 %v73, %v69
    %v82 = vpack.c.b16 %v74, %v70
    %v83 = vpack.c.b16 %v75, %v71
    %vm92 = vcmask 261120
    %v94 = vsel %vm92, %v43, 0
    %96 = vmatprep.subr.bf16.mxu0 0
    %97 = vmatpush1.bf16.msra.mxu0 0
    %98 = vmatprep.subr.bf16.mxu0 0
    %99 = vmatpush1.bf16.msra.mxu0 0
    %100 = vmatprep.subr.bf16.mxu0 0
    %101 = vmatpush1.bf16.msra.mxu0 0
    %102 = vmatprep.subr.bf16.mxu0 0
    %103 = vmatpush1.bf16.msra.mxu0 0
    %104 = vmatprep.subr.bf16.mxu0 0
    %105 = vmatpush1.bf16.msra.mxu0 0
    %106 = vmatprep.subr.bf16.mxu0 0
    %107 = vmatpush1.bf16.msra.mxu0 0
    %108 = vmatprep.subr.bf16.mxu0 %v81
    %109 = vmatpush1.bf16.msra.mxu0 %v80
    %110 = vmatprep.subr.bf16.mxu0 %v77
    %111 = vmatpush1.bf16.msra.mxu0 %v76
    %112 = vmatprep.subr.bf16.mxu0 0
    %113 = vmatpush2.bf16.msra.mxu0 0
    %114 = vmatprep.subr.bf16.mxu0 0
    %115 = vmatpush2.bf16.msra.mxu0 0
    %116 = vmatprep.subr.bf16.mxu0 0
    %117 = vmatpush2.bf16.msra.mxu0 0
    %118 = vmatprep.subr.bf16.mxu0 0
    %119 = vmatpush2.bf16.msra.mxu0 0
    %120 = vmatprep.subr.bf16.mxu0 0
    %121 = vmatpush2.bf16.msra.mxu0 0
    %122 = vmatprep.subr.bf16.mxu0 0
    %123 = vmatpush2.bf16.msra.mxu0 0
    %124 = vmatprep.subr.bf16.mxu0 0
    %125 = vmatpush2.bf16.msra.mxu0 0
    %126 = vmatprep.subr.bf16.mxu0 0
    %127 = vmatpush2.bf16.msra.mxu0 0
    %128 = vmatprep.mubr.bf16.mxu0 0
    %129 = vmatmul.mubr.bf16.gmra.mxu0 %v94
    %v130 = vpop.f32.mrf.mxu0
    %v131 = vadd.f32 0.0, %v130
    %v132 = vpop.f32.mrf.mxu0
    %v133 = vadd.f32 0.0, %v132
    %v134 = vpop.f32.mrf.mxu0
    %v135 = vpop.f32.mrf.mxu0
    %136 = vdwg.mxu0
    %137 = vmatprep.subr.bf16.mxu0 0
    %138 = vmatpush1.bf16.msra.mxu0 0
    %139 = vmatprep.subr.bf16.mxu0 0
    %140 = vmatpush1.bf16.msra.mxu0 0
    %141 = vmatprep.subr.bf16.mxu0 0
    %142 = vmatpush1.bf16.msra.mxu0 0
    %143 = vmatprep.subr.bf16.mxu0 0
    %144 = vmatpush1.bf16.msra.mxu0 0
    %145 = vmatprep.subr.bf16.mxu0 0
    %146 = vmatpush1.bf16.msra.mxu0 0
    %147 = vmatprep.subr.bf16.mxu0 0
    %148 = vmatpush1.bf16.msra.mxu0 0
    %149 = vmatprep.subr.bf16.mxu0 %v83
    %150 = vmatpush1.bf16.msra.mxu0 %v82
    %151 = vmatprep.subr.bf16.mxu0 %v79
    %152 = vmatpush1.bf16.msra.mxu0 %v78
    %153 = vmatprep.subr.bf16.mxu0 0
    %154 = vmatpush2.bf16.msra.mxu0 0
    %155 = vmatprep.subr.bf16.mxu0 0
    %156 = vmatpush2.bf16.msra.mxu0 0
    %157 = vmatprep.subr.bf16.mxu0 0
    %158 = vmatpush2.bf16.msra.mxu0 0
    %159 = vmatprep.subr.bf16.mxu0 0
    %160 = vmatpush2.bf16.msra.mxu0 0
    %161 = vmatprep.subr.bf16.mxu0 0
    %162 = vmatpush2.bf16.msra.mxu0 0
    %163 = vmatprep.subr.bf16.mxu0 0
    %164 = vmatpush2.bf16.msra.mxu0 0
    %165 = vmatprep.subr.bf16.mxu0 0
    %166 = vmatpush2.bf16.msra.mxu0 0
    %167 = vmatprep.subr.bf16.mxu0 0
    %168 = vmatpush2.bf16.msra.mxu0 0
    %169 = vmatprep.mubr.bf16.mxu0 0
    %170 = vmatmul.mubr.bf16.gmra.mxu0 %v94
    %v171 = vpop.f32.mrf.mxu0
    %v172 = vadd.f32 0.0, %v171
    %v173 = vpop.f32.mrf.mxu0
    %v174 = vadd.f32 0.0, %v173
    %v175 = vpop.f32.mrf.mxu0
    %v176 = vpop.f32.mrf.mxu0
    %177 = vdwg.mxu0
    %v186 = vunpack.c.l.b16 %v34
    %v187 = vunpack.c.h.b16 %v34
    %v188 = vunpack.c.l.b16 %v35
    %v189 = vunpack.c.h.b16 %v35
    %v190 = vunpack.c.l.b16 %v36
    %v191 = vunpack.c.h.b16 %v36
    %v192 = vunpack.c.l.b16 %v37
    %v193 = vunpack.c.h.b16 %v37
    %v194 = vunpack.c.l.b16 %v38
    %v195 = vunpack.c.h.b16 %v38
    %v196 = vunpack.c.l.b16 %v39
    %v197 = vunpack.c.h.b16 %v39
    %v198 = vunpack.c.l.b16 %v40
    %v199 = vunpack.c.h.b16 %v40
    %v200 = vunpack.c.l.b16 %v41
    %v201 = vunpack.c.h.b16 %v41
    %v202 = vpack.c.b16 %v190, %v186
    %v203 = vpack.c.b16 %v191, %v187
    %v204 = vpack.c.b16 %v192, %v188
    %v205 = vpack.c.b16 %v193, %v189
    %v206 = vpack.c.b16 %v198, %v194
    %v207 = vpack.c.b16 %v199, %v195
    %v208 = vpack.c.b16 %v200, %v196
    %v209 = vpack.c.b16 %v201, %v197
    %v219 = vsel %vm92, %v33, 0
    %221 = vmatprep.subr.bf16.mxu0 0
    %222 = vmatpush1.bf16.msra.mxu0 0
    %223 = vmatprep.subr.bf16.mxu0 0
    %224 = vmatpush1.bf16.msra.mxu0 0
    %225 = vmatprep.subr.bf16.mxu0 0
    %226 = vmatpush1.bf16.msra.mxu0 0
    %227 = vmatprep.subr.bf16.mxu0 0
    %228 = vmatpush1.bf16.msra.mxu0 0
    %229 = vmatprep.subr.bf16.mxu0 0
    %230 = vmatpush1.bf16.msra.mxu0 0
    %231 = vmatprep.subr.bf16.mxu0 0
    %232 = vmatpush1.bf16.msra.mxu0 0
    %233 = vmatprep.subr.bf16.mxu0 %v207
    %234 = vmatpush1.bf16.msra.mxu0 %v206
    %235 = vmatprep.subr.bf16.mxu0 %v203
    %236 = vmatpush1.bf16.msra.mxu0 %v202
    %237 = vmatprep.subr.bf16.mxu0 0
    %238 = vmatpush2.bf16.msra.mxu0 0
    %239 = vmatprep.subr.bf16.mxu0 0
    %240 = vmatpush2.bf16.msra.mxu0 0
    %241 = vmatprep.subr.bf16.mxu0 0
    %242 = vmatpush2.bf16.msra.mxu0 0
    %243 = vmatprep.subr.bf16.mxu0 0
    %244 = vmatpush2.bf16.msra.mxu0 0
    %245 = vmatprep.subr.bf16.mxu0 0
    %246 = vmatpush2.bf16.msra.mxu0 0
    %247 = vmatprep.subr.bf16.mxu0 0
    %248 = vmatpush2.bf16.msra.mxu0 0
    %249 = vmatprep.subr.bf16.mxu0 0
    %250 = vmatpush2.bf16.msra.mxu0 0
    %251 = vmatprep.subr.bf16.mxu0 0
    %252 = vmatpush2.bf16.msra.mxu0 0
    %253 = vmatprep.mubr.bf16.mxu0 0
    %254 = vmatmul.mubr.bf16.gmra.mxu0 %v219
    %v255 = vpop.f32.mrf.mxu0
    %v256 = vadd.f32 %v131, %v255
    %v257 = vpop.f32.mrf.mxu0
    %v258 = vadd.f32 %v133, %v257
    %v259 = vpop.f32.mrf.mxu0
    %v260 = vpop.f32.mrf.mxu0
    %261 = vdwg.mxu0
    %262 = vmatprep.subr.bf16.mxu0 0
    %263 = vmatpush1.bf16.msra.mxu0 0
    %264 = vmatprep.subr.bf16.mxu0 0
    %265 = vmatpush1.bf16.msra.mxu0 0
    %266 = vmatprep.subr.bf16.mxu0 0
    %267 = vmatpush1.bf16.msra.mxu0 0
    %268 = vmatprep.subr.bf16.mxu0 0
    %269 = vmatpush1.bf16.msra.mxu0 0
    %270 = vmatprep.subr.bf16.mxu0 0
    %271 = vmatpush1.bf16.msra.mxu0 0
    %272 = vmatprep.subr.bf16.mxu0 0
    %273 = vmatpush1.bf16.msra.mxu0 0
    %274 = vmatprep.subr.bf16.mxu0 %v209
    %275 = vmatpush1.bf16.msra.mxu0 %v208
    %276 = vmatprep.subr.bf16.mxu0 %v205
    %277 = vmatpush1.bf16.msra.mxu0 %v204
    %278 = vmatprep.subr.bf16.mxu0 0
    %279 = vmatpush2.bf16.msra.mxu0 0
    %280 = vmatprep.subr.bf16.mxu0 0
    %281 = vmatpush2.bf16.msra.mxu0 0
    %282 = vmatprep.subr.bf16.mxu0 0
    %283 = vmatpush2.bf16.msra.mxu0 0
    %284 = vmatprep.subr.bf16.mxu0 0
    %285 = vmatpush2.bf16.msra.mxu0 0
    %286 = vmatprep.subr.bf16.mxu0 0
    %287 = vmatpush2.bf16.msra.mxu0 0
    %288 = vmatprep.subr.bf16.mxu0 0
    %289 = vmatpush2.bf16.msra.mxu0 0
    %290 = vmatprep.subr.bf16.mxu0 0
    %291 = vmatpush2.bf16.msra.mxu0 0
    %292 = vmatprep.subr.bf16.mxu0 0
    %293 = vmatpush2.bf16.msra.mxu0 0
    %294 = vmatprep.mubr.bf16.mxu0 0
    %295 = vmatmul.mubr.bf16.gmra.mxu0 %v219
    %v296 = vpop.f32.mrf.mxu0
    %v297 = vadd.f32 %v172, %v296
    %v298 = vpop.f32.mrf.mxu0
    %v299 = vadd.f32 %v174, %v298
    %v300 = vpop.f32.mrf.mxu0
    %v301 = vpop.f32.mrf.mxu0
    %302 = vdwg.mxu0
    %v303 = vld [vmem:[%s5] sm:$0xf]
    %v305 = vlaneseq
    %v306 = vshrl.u32 %v305, 7
    %v307 = vsub.s32 0, %v306
    %v308 = vrot.slane %v303, %v307
    %v309 = vlaneseq
    %v310 = vshrl.u32 %v309, 7
    %v311 = vsub.s32 1, %v310
    %v312 = vrot.slane %v303, %v311
    %v313 = vlaneseq
    %v314 = vshrl.u32 %v313, 7
    %v315 = vsub.s32 2, %v314
    %v316 = vrot.slane %v303, %v315
    %v317 = vlaneseq
    %v318 = vshrl.u32 %v317, 7
    %v319 = vsub.s32 3, %v318
    %v320 = vrot.slane %v303, %v319
    %v325 = vadd.f32 %v256, %v308
    %v326 = vadd.f32 %v258, %v312
    %v327 = vadd.f32 %v297, %v316
    %v328 = vadd.f32 %v299, %v320
    %v329 = vxor.u32 %v325, 2147483648
    %v330 = vmul.f32 %v329, 1.442695
    %v331 = vpow.pop %v330
    %v332 = vadd.f32 %v331, 1.0
    %v333 = vrcp.pop %v332
    %v334 = vmul.f32 1.0, %v333
    %v335 = vxor.u32 %v326, 2147483648
    %v336 = vmul.f32 %v335, 1.442695
    %v337 = vpow.pop %v336
    %v338 = vadd.f32 %v337, 1.0
    %v339 = vrcp.pop %v338
    %v340 = vmul.f32 1.0, %v339
    %v341 = vtanh.pop %v327
    %v342 = vxor.u32 %v328, 2147483648
    %v343 = vmul.f32 %v342, 1.442695
    %v344 = vpow.pop %v343
    %v345 = vadd.f32 %v344, 1.0
    %v346 = vrcp.pop %v345
    %v347 = vmul.f32 1.0, %v346
    %v348 = vld [vmem:[%s2] sm:$0xff]
    %v349 = vmul.f32 %v340, %v348
    %v350 = vmul.f32 %v334, %v341
    %v351 = vadd.f32 %v349, %v350
    %v352 = vtanh.pop %v351
    %v353 = vmul.f32 %v347, %v352
    %354 = vst [vmem:[%s6] sm:$0xff] %v353
    %355 = vst [vmem:[#allocation2] sm:$0xff] %v351
    %356 = vst [vmem:[#allocation4] sm:$0xff] %v334
    %357 = vst [vmem:[#allocation6] sm:$0xff] %v340
    %358 = vst [vmem:[#allocation7] sm:$0xff] %v347
    // Predicated region
    $region26: #{analysable_lstm_cell.1} parent=1 // pred_check
      _
    $region27: #{analysable_lstm_cell.1} parent=1 // pred_check_branch
      %360 = sbr.rel (0) target = $region29
    $region28: #{analysable_lstm_cell.1} parent=1 // pred_region
      _
    $region29: #{analysable_lstm_cell.1} parent=1 // pred_fallthru
      _
    // Predicated region
    $region30: #{analysable_lstm_cell.1} parent=1 // pred_check
      _
    $region31: #{analysable_lstm_cell.1} parent=1 // pred_check_branch
      %362 = sbr.rel (0) target = $region33
    $region32: #{analysable_lstm_cell.1} parent=1 // pred_region
      %s364 = ssub.s32 128, 128
      %365 = vsyncadd [#allocation3], %s364
      %s367 = sshll.u32 [#allocation2], 4
      %s368 = int_to_ptr.vmem [resolvable:$true] %s367
      %370 = dma.vmem_to_hbm [thread:$0]  %s368, 128, %s7, [#allocation3]
    $region33: #{analysable_lstm_cell.1} parent=1 // pred_fallthru
      _
    // Predicated region
    $region34: #{analysable_lstm_cell.1} parent=1 // pred_check
      _
    $region35: #{analysable_lstm_cell.1} parent=1 // pred_check_branch
      %372 = sbr.rel (0) target = $region37
    $region36: #{analysable_lstm_cell.1} parent=1 // pred_region
      %s374 = ssub.s32 128, 128
      %375 = vsyncadd [#allocation5], %s374
      %s377 = sshll.u32 [#allocation4], 4
      %s378 = int_to_ptr.vmem [resolvable:$true] %s377
      %380 = dma.vmem_to_hbm [thread:$0]  %s378, 128, %s8, [#allocation5]
    $region37: #{analysable_lstm_cell.1} parent=1 // pred_fallthru
      _
    // Predicated region
    $region38: #{analysable_lstm_cell.1} parent=1 // pred_check
      _
    $region39: #{analysable_lstm_cell.1} parent=1 // pred_check_branch
      %382 = sbr.rel (0) target = $region41
    $region40: #{analysable_lstm_cell.1} parent=1 // pred_region
      %s384 = ssub.s32 128, 128
      %385 = vsyncadd [#allocation5], %s384
      %s387 = sshll.u32 [#allocation6], 4
      %s388 = int_to_ptr.vmem [resolvable:$true] %s387
      %390 = dma.vmem_to_hbm [thread:$0]  %s388, 128, %s9, [#allocation5]
    $region41: #{analysable_lstm_cell.1} parent=1 // pred_fallthru
      _
    // Predicated region
    $region42: #{analysable_lstm_cell.1} parent=1 // pred_check
      _
    $region43: #{analysable_lstm_cell.1} parent=1 // pred_check_branch
      %392 = sbr.rel (0) target = $region45
    $region44: #{analysable_lstm_cell.1} parent=1 // pred_region
      %s394 = ssub.s32 128, 128
      %395 = vsyncadd [#allocation8], %s394
      %s397 = sshll.u32 [#allocation7], 4
      %s398 = int_to_ptr.vmem [resolvable:$true] %s397
      %400 = dma.vmem_to_hbm [thread:$0]  %s398, 128, %s10, [#allocation8]
    $region45: #{analysable_lstm_cell.1} parent=1 // pred_fallthru
      _
    // Predicated region
    $region46: #{analysable_lstm_cell.1} parent=1 // pred_check
      _
    $region47: #{analysable_lstm_cell.1} parent=1 // pred_check_branch
      %402 = sbr.rel (0) target = $region49
    $region48: #{analysable_lstm_cell.1} parent=1 // pred_region
      _
    $region49: #{analysable_lstm_cell.1} parent=1 // pred_fallthru
      _
    // Predicated region
    $region50: #{analysable_lstm_cell.1} parent=1 // pred_check
      _
    $region51: #{analysable_lstm_cell.1} parent=1 // pred_check_branch
      %404 = sbr.rel (0) target = $region53
    $region52: #{analysable_lstm_cell.1} parent=1 // pred_region
      %405 = dma.done [#allocation3], 128
    $region53: #{analysable_lstm_cell.1} parent=1 // pred_fallthru
      _
    // Predicated region
    $region54: #{analysable_lstm_cell.1} parent=1 // pred_check
      _
    $region55: #{analysable_lstm_cell.1} parent=1 // pred_check_branch
      %407 = sbr.rel (0) target = $region57
    $region56: #{analysable_lstm_cell.1} parent=1 // pred_region
      %408 = dma.done [#allocation5], 128
    $region57: #{analysable_lstm_cell.1} parent=1 // pred_fallthru
      _
    // Predicated region
    $region58: #{analysable_lstm_cell.1} parent=1 // pred_check
      _
    $region59: #{analysable_lstm_cell.1} parent=1 // pred_check_branch
      %410 = sbr.rel (0) target = $region61
    $region60: #{analysable_lstm_cell.1} parent=1 // pred_region
      %411 = dma.done [#allocation5], 128
    $region61: #{analysable_lstm_cell.1} parent=1 // pred_fallthru
      _
    // Predicated region
    $region62: #{analysable_lstm_cell.1} parent=1 // pred_check
      _
    $region63: #{analysable_lstm_cell.1} parent=1 // pred_check_branch
      %413 = sbr.rel (0) target = $region65
    $region64: #{analysable_lstm_cell.1} parent=1 // pred_region
      %414 = dma.done [#allocation8], 128
    $region65: #{analysable_lstm_cell.1} parent=1 // pred_fallthru
      _
    %415 = vsyncpa [#allocation3], 1
    %416 = vsyncpa [#allocation5], 1
    %417 = vsyncpa [#allocation8], 1

</llo_original>
